<compile_context>
chip_gen: v6e
topology: v6e:2x2x1
jax: 0.10.0
libtpu: 0.0.40
codegen_flags: <defaults>
</compile_context>

<pallas_src>
import functools
import math

import jax
import jax.numpy as jnp
from jax import lax
from jax.experimental import pallas as pl
from jax.experimental.pallas import tpu as pltpu

_LANES = 128
_SUBLANES = 8
_CHUNK = _LANES * _SUBLANES   # 1024 batch elements = one f32 vreg per stage


def _round_up(x, m):
    return ((x + m - 1) // m) * m


def _disc_kernel(x_ref, w_ref, o_ref, *, hidden, in_dim, n_chunks, unroll):
    """One batch tile.

    x_ref: VMEM (in_dim, rows, 128)                 feature-major batch tile
    w_ref: VMEM (hidden+1, in_dim+2, 8, 128)        pre-splatted coefficients:
             rows 0..hidden-1: [w1[j, 0..in_dim-1], b1[j], (1-a)/2 * w2[j]]
             row  hidden     : [d[0..in_dim-1],     db,    0]   (folded linear)
    o_ref: VMEM (rows, 128)                         sigmoid output tile
    """

    def chunk(ci, carry):
        r0 = pl.multiple_of(ci * _SUBLANES, _SUBLANES)
        xs = [x_ref[k, pl.ds(r0, _SUBLANES), :] for k in range(in_dim)]  # (8,128) each

        # Folded linear term: db + sum_k d_k * x_k
        # (closed form of beta * w2.h + b2 with beta = (1+alpha)/2).
        acc0 = w_ref[hidden, in_dim]
        for k in range(in_dim):
            acc0 = acc0 + w_ref[hidden, k] * xs[k]

        # Nonlinear term: sum_j ((1-alpha)/2 * w2_j) * |h_j|.
        # 4-way accumulator split keeps the serial add chain short.
        accs = [acc0] + [jnp.zeros_like(acc0) for _ in range(3)]
        for j in range(hidden):                       # static unroll over hidden
            h = w_ref[j, in_dim]                      # b1_j splat
            for k in range(in_dim):
                h = h + w_ref[j, k] * xs[k]
            accs[j % 4] = accs[j % 4] + w_ref[j, in_dim + 1] * jnp.abs(h)
        z = (accs[0] + accs[1]) + (accs[2] + accs[3])

        # sigmoid(z) = 0.5 * tanh(0.5 * z) + 0.5  (tanh runs on the EUP slot).
        o_ref[pl.ds(r0, _SUBLANES), :] = 0.5 * jnp.tanh(0.5 * z) + 0.5
        return carry

    lax.fori_loop(0, n_chunks, chunk, 0, unroll=unroll)


@functools.partial(jax.jit, static_argnames=("tb",))
def discriminator_1d_cnn(x, w1, b1, w2, b2, prelu_alpha, *, tb=32768):
    """Forward pass of Discriminator_1D_CNN (PReLU branch; alpha=0 gives ReLU).

    x:  (B, input_dim) float32
    w1: (hidden, input_dim), b1: (hidden,)      -- PyTorch nn.Linear layout
    w2: (1, hidden),         b2: (1,)
    prelu_alpha: scalar (Python float or array) -- nn.PReLU shared slope
    returns (B, 1) float32
    """
    B, in_dim = x.shape
    hidden = w1.shape[0]

    # ---- tile geometry: batch lives on (sublane, lane) = (8, 128) vregs ----
    tb = max(_CHUNK, (int(tb) // _CHUNK) * _CHUNK)
    tb = min(tb, _round_up(B, _CHUNK))
    b_pad = _round_up(B, tb)
    grid = (b_pad // tb,)
    rows = tb // _LANES
    n_chunks = tb // _CHUNK
    unroll = math.gcd(n_chunks, 8)

    # ---- fold layer2 . PReLU . layer1 into per-unit + linear coefficients --
    alpha = jnp.asarray(prelu_alpha, jnp.float32).reshape(())
    beta, gamma = 0.5 * (1.0 + alpha), 0.5 * (1.0 - alpha)
    w1f = jnp.asarray(w1, jnp.float32).reshape(hidden, in_dim)
    b1f = jnp.asarray(b1, jnp.float32).reshape(hidden)
    w2f = jnp.asarray(w2, jnp.float32).reshape(hidden)
    b2f = jnp.asarray(b2, jnp.float32).reshape(())

    d = beta * (w2f @ w1f)                      # (in_dim,) linear-in-x coefficients
    db = b2f + beta * jnp.dot(w2f, b1f)         # ()        linear bias
    v = gamma * w2f                             # (hidden,) |h_j| coefficients

    per_unit = jnp.concatenate([w1f, b1f[:, None], v[:, None]], axis=1)
    lin_row = jnp.concatenate([d, db[None], jnp.zeros((1,), jnp.float32)])[None, :]
    coef = jnp.concatenate([per_unit, lin_row], axis=0)      # (hidden+1, in_dim+2)
    # Pre-splat each scalar to a full (8,128) vreg -> zero broadcast ops in-kernel.
    w_splat = jnp.broadcast_to(coef[:, :, None, None],
                               (hidden + 1, in_dim + 2, _SUBLANES, _LANES))

    # ---- x: (B, in_dim) -> feature-major (in_dim, rows_total, 128) ---------
    # (single fused transpose+pad HBM pass; padded tail columns are zeros and
    #  are sliced off below)
    x_t = jnp.pad(jnp.asarray(x, jnp.float32).T, ((0, 0), (0, b_pad - B)))
    x_t = x_t.reshape(in_dim, b_pad // _LANES, _LANES)

    kernel = functools.partial(_disc_kernel, hidden=hidden, in_dim=in_dim,
                               n_chunks=n_chunks, unroll=unroll)

    out = pl.pallas_call(
        kernel,
        out_shape=jax.ShapeDtypeStruct((b_pad // _LANES, _LANES), jnp.float32),
        grid=grid,
        in_specs=[
            pl.BlockSpec((in_dim, rows, _LANES), lambda i: (0, i, 0)),   # x tile
            pl.BlockSpec((hidden + 1, in_dim + 2, _SUBLANES, _LANES),
                         lambda i: (0, 0, 0, 0)),                        # coeffs (resident)
        ],
        out_specs=pl.BlockSpec((rows, _LANES), lambda i: (i, 0)),        # full-vreg stores
        compiler_params=pltpu.CompilerParams(
            dimension_semantics=("parallel",)),                          # megacore on v7x
    )(x_t, w_splat)

    return out.reshape(b_pad)[:B].reshape(B, 1)


def init_params(key, input_dim=2, hidden=25, out_dim=1):
    """Deterministic init mimicking nn.Linear's uniform(-1/sqrt(fan_in), +)."""
    k1, k2, k3, k4 = jax.random.split(key, 4)
    lim1 = 1.0 / jnp.sqrt(jnp.float32(input_dim))
    lim2 = 1.0 / jnp.sqrt(jnp.float32(hidden))
    w1 = jax.random.uniform(k1, (hidden, input_dim), jnp.float32, -lim1, lim1)
    b1 = jax.random.uniform(k2, (hidden,), jnp.float32, -lim1, lim1)
    w2 = jax.random.uniform(k3, (out_dim, hidden), jnp.float32, -lim2, lim2)
    b2 = jax.random.uniform(k4, (out_dim,), jnp.float32, -lim2, lim2)
    prelu_alpha = jnp.array(0.25, jnp.float32)  # nn.PReLU default init
    return w1, b1, w2, b2, prelu_alpha


def reference_forward(x, w1, b1, w2, b2, alpha):
    h = x @ w1.T + b1
    h = jnp.where(h >= 0.0, h, alpha * h)
    z = h @ w2.T + b2
    return jax.nn.sigmoid(z)


if __name__ == "__main__":
    key = jax.random.PRNGKey(0)
    kx, kp, kx2 = jax.random.split(key, 3)

    INPUT_DIM, HIDDEN = 2, 25
    w1, b1, w2, b2, alpha = init_params(kp, input_dim=INPUT_DIM, hidden=HIDDEN)

    # Small batch: single grid step, single inner chunk.
    B = 8
    x = jax.random.normal(kx, (B, INPUT_DIM), jnp.float32)
    out = jax.block_until_ready(discriminator_1d_cnn(x, w1, b1, w2, b2, alpha))
    ref = reference_forward(x, w1, b1, w2, b2, alpha)
    assert out.shape == (B, 1)
    assert jnp.allclose(out, ref, atol=1e-5, rtol=1e-5), (out, ref)

    # Non-multiple batch with a small tile: exercises the grid (3 steps), the
    # inner chunk loop (2 chunks/tile, partial unroll) and the padded tail.
    B2 = 5000
    x2 = jax.random.normal(kx2, (B2, INPUT_DIM), jnp.float32)
    out2 = jax.block_until_ready(
        discriminator_1d_cnn(x2, w1, b1, w2, b2, alpha, tb=2048))
    ref2 = reference_forward(x2, w1, b1, w2, b2, alpha)
    assert out2.shape == (B2, 1)
    assert jnp.allclose(out2, ref2, atol=1e-5, rtol=1e-5)

    print("KERNEL_OK")
</pallas_src>

<mosaic_0001>
module attributes {stable_mosaic.version = 11 : i64} {
  func.func @_disc_kernel(%arg0: i32, %arg1: memref<2x8x128xf32, #tpu.memory_space<vmem>>, %arg2: memref<26x4x8x128xf32, #tpu.memory_space<vmem>>, %arg3: memref<8x128xf32, #tpu.memory_space<vmem>>) attributes {dimension_semantics = [#tpu.dimension_semantics<parallel>], iteration_bounds = array<i64: 1>, scalar_prefetch = 0 : i64, scratch_operands = 0 : i64, tpu.core_type = #tpu.core_type<tc>, window_params = [{transform_indices = @transform_0, window_bounds = array<i64: 2, 8, 128>}, {pipeline_mode = #tpu.pipeline_mode<synchronous>, transform_indices = @transform_1, window_bounds = array<i64: 26, 4, 8, 128>}, {transform_indices = @transform_2, window_bounds = array<i64: 8, 128>}]} {
    %c0_i32 = arith.constant 0 : i32
    %c8_i32 = arith.constant 8 : i32
    %0 = arith.muli %c0_i32, %c8_i32 : i32
    %1 = tpu.assume_multiple %0, 8 : i32
    %c0 = arith.constant 0 : index
    %2 = arith.index_cast %1 : i32 to index
    %c0_0 = arith.constant 0 : index
    %3 = vector.load %arg1[%c0, %2, %c0_0] : memref<2x8x128xf32, #tpu.memory_space<vmem>>, vector<1x8x128xf32>
    %4 = vector.shape_cast %3 : vector<1x8x128xf32> to vector<8x128xf32>
    %c1 = arith.constant 1 : index
    %5 = arith.index_cast %1 : i32 to index
    %c0_1 = arith.constant 0 : index
    %6 = vector.load %arg1[%c1, %5, %c0_1] : memref<2x8x128xf32, #tpu.memory_space<vmem>>, vector<1x8x128xf32>
    %7 = vector.shape_cast %6 : vector<1x8x128xf32> to vector<8x128xf32>
    %c25 = arith.constant 25 : index
    %c2 = arith.constant 2 : index
    %c0_2 = arith.constant 0 : index
    %c0_3 = arith.constant 0 : index
    %8 = vector.load %arg2[%c25, %c2, %c0_2, %c0_3] : memref<26x4x8x128xf32, #tpu.memory_space<vmem>>, vector<1x1x8x128xf32>
    %9 = vector.shape_cast %8 : vector<1x1x8x128xf32> to vector<8x128xf32>
    %c25_4 = arith.constant 25 : index
    %c0_5 = arith.constant 0 : index
    %c0_6 = arith.constant 0 : index
    %c0_7 = arith.constant 0 : index
    %10 = vector.load %arg2[%c25_4, %c0_5, %c0_6, %c0_7] : memref<26x4x8x128xf32, #tpu.memory_space<vmem>>, vector<1x1x8x128xf32>
    %11 = vector.shape_cast %10 : vector<1x1x8x128xf32> to vector<8x128xf32>
    %12 = arith.mulf %11, %4 : vector<8x128xf32>
    %13 = arith.addf %9, %12 : vector<8x128xf32>
    %c25_8 = arith.constant 25 : index
    %c1_9 = arith.constant 1 : index
    %c0_10 = arith.constant 0 : index
    %c0_11 = arith.constant 0 : index
    %14 = vector.load %arg2[%c25_8, %c1_9, %c0_10, %c0_11] : memref<26x4x8x128xf32, #tpu.memory_space<vmem>>, vector<1x1x8x128xf32>
    %15 = vector.shape_cast %14 : vector<1x1x8x128xf32> to vector<8x128xf32>
    %16 = arith.mulf %15, %7 : vector<8x128xf32>
    %17 = arith.addf %13, %16 : vector<8x128xf32>
    %cst = arith.constant 0.000000e+00 : f32
    %18 = vector.broadcast %cst : f32 to vector<8x128xf32>
    %cst_12 = arith.constant 0.000000e+00 : f32
    %19 = vector.broadcast %cst_12 : f32 to vector<8x128xf32>
    %cst_13 = arith.constant 0.000000e+00 : f32
    %20 = vector.broadcast %cst_13 : f32 to vector<8x128xf32>
    %c0_14 = arith.constant 0 : index
    %c2_15 = arith.constant 2 : index
    %c0_16 = arith.constant 0 : index
    %c0_17 = arith.constant 0 : index
    %21 = vector.load %arg2[%c0_14, %c2_15, %c0_16, %c0_17] : memref<26x4x8x128xf32, #tpu.memory_space<vmem>>, vector<1x1x8x128xf32>
    %22 = vector.shape_cast %21 : vector<1x1x8x128xf32> to vector<8x128xf32>
    %c0_18 = arith.constant 0 : index
    %c0_19 = arith.constant 0 : index
    %c0_20 = arith.constant 0 : index
    %c0_21 = arith.constant 0 : index
    %23 = vector.load %arg2[%c0_18, %c0_19, %c0_20, %c0_21] : memref<26x4x8x128xf32, #tpu.memory_space<vmem>>, vector<1x1x8x128xf32>
    %24 = vector.shape_cast %23 : vector<1x1x8x128xf32> to vector<8x128xf32>
    %25 = arith.mulf %24, %4 : vector<8x128xf32>
    %26 = arith.addf %22, %25 : vector<8x128xf32>
    %c0_22 = arith.constant 0 : index
    %c1_23 = arith.constant 1 : index
    %c0_24 = arith.constant 0 : index
    %c0_25 = arith.constant 0 : index
    %27 = vector.load %arg2[%c0_22, %c1_23, %c0_24, %c0_25] : memref<26x4x8x128xf32, #tpu.memory_space<vmem>>, vector<1x1x8x128xf32>
    %28 = vector.shape_cast %27 : vector<1x1x8x128xf32> to vector<8x128xf32>
    %29 = arith.mulf %28, %7 : vector<8x128xf32>
    %30 = arith.addf %26, %29 : vector<8x128xf32>
    %c0_26 = arith.constant 0 : index
    %c3 = arith.constant 3 : index
    %c0_27 = arith.constant 0 : index
    %c0_28 = arith.constant 0 : index
    %31 = vector.load %arg2[%c0_26, %c3, %c0_27, %c0_28] : memref<26x4x8x128xf32, #tpu.memory_space<vmem>>, vector<1x1x8x128xf32>
    %32 = vector.shape_cast %31 : vector<1x1x8x128xf32> to vector<8x128xf32>
    %33 = math.absf %30 : vector<8x128xf32>
    %34 = arith.mulf %32, %33 : vector<8x128xf32>
    %35 = arith.addf %17, %34 : vector<8x128xf32>
    %c1_29 = arith.constant 1 : index
    %c2_30 = arith.constant 2 : index
    %c0_31 = arith.constant 0 : index
    %c0_32 = arith.constant 0 : index
    %36 = vector.load %arg2[%c1_29, %c2_30, %c0_31, %c0_32] : memref<26x4x8x128xf32, #tpu.memory_space<vmem>>, vector<1x1x8x128xf32>
    %37 = vector.shape_cast %36 : vector<1x1x8x128xf32> to vector<8x128xf32>
    %c1_33 = arith.constant 1 : index
    %c0_34 = arith.constant 0 : index
    %c0_35 = arith.constant 0 : index
    %c0_36 = arith.constant 0 : index
    %38 = vector.load %arg2[%c1_33, %c0_34, %c0_35, %c0_36] : memref<26x4x8x128xf32, #tpu.memory_space<vmem>>, vector<1x1x8x128xf32>
    %39 = vector.shape_cast %38 : vector<1x1x8x128xf32> to vector<8x128xf32>
    %40 = arith.mulf %39, %4 : vector<8x128xf32>
    %41 = arith.addf %37, %40 : vector<8x128xf32>
    %c1_37 = arith.constant 1 : index
    %c1_38 = arith.constant 1 : index
    %c0_39 = arith.constant 0 : index
    %c0_40 = arith.constant 0 : index
    %42 = vector.load %arg2[%c1_37, %c1_38, %c0_39, %c0_40] : memref<26x4x8x128xf32, #tpu.memory_space<vmem>>, vector<1x1x8x128xf32>
    %43 = vector.shape_cast %42 : vector<1x1x8x128xf32> to vector<8x128xf32>
    %44 = arith.mulf %43, %7 : vector<8x128xf32>
    %45 = arith.addf %41, %44 : vector<8x128xf32>
    %c1_41 = arith.constant 1 : index
    %c3_42 = arith.constant 3 : index
    %c0_43 = arith.constant 0 : index
    %c0_44 = arith.constant 0 : index
    %46 = vector.load %arg2[%c1_41, %c3_42, %c0_43, %c0_44] : memref<26x4x8x128xf32, #tpu.memory_space<vmem>>, vector<1x1x8x128xf32>
    %47 = vector.shape_cast %46 : vector<1x1x8x128xf32> to vector<8x128xf32>
    %48 = math.absf %45 : vector<8x128xf32>
    %49 = arith.mulf %47, %48 : vector<8x128xf32>
    %50 = arith.addf %18, %49 : vector<8x128xf32>
    %c2_45 = arith.constant 2 : index
    %c2_46 = arith.constant 2 : index
    %c0_47 = arith.constant 0 : index
    %c0_48 = arith.constant 0 : index
    %51 = vector.load %arg2[%c2_45, %c2_46, %c0_47, %c0_48] : memref<26x4x8x128xf32, #tpu.memory_space<vmem>>, vector<1x1x8x128xf32>
    %52 = vector.shape_cast %51 : vector<1x1x8x128xf32> to vector<8x128xf32>
    %c2_49 = arith.constant 2 : index
    %c0_50 = arith.constant 0 : index
    %c0_51 = arith.constant 0 : index
    %c0_52 = arith.constant 0 : index
    %53 = vector.load %arg2[%c2_49, %c0_50, %c0_51, %c0_52] : memref<26x4x8x128xf32, #tpu.memory_space<vmem>>, vector<1x1x8x128xf32>
    %54 = vector.shape_cast %53 : vector<1x1x8x128xf32> to vector<8x128xf32>
    %55 = arith.mulf %54, %4 : vector<8x128xf32>
    %56 = arith.addf %52, %55 : vector<8x128xf32>
    %c2_53 = arith.constant 2 : index
    %c1_54 = arith.constant 1 : index
    %c0_55 = arith.constant 0 : index
    %c0_56 = arith.constant 0 : index
    %57 = vector.load %arg2[%c2_53, %c1_54, %c0_55, %c0_56] : memref<26x4x8x128xf32, #tpu.memory_space<vmem>>, vector<1x1x8x128xf32>
    %58 = vector.shape_cast %57 : vector<1x1x8x128xf32> to vector<8x128xf32>
    %59 = arith.mulf %58, %7 : vector<8x128xf32>
    %60 = arith.addf %56, %59 : vector<8x128xf32>
    %c2_57 = arith.constant 2 : index
    %c3_58 = arith.constant 3 : index
    %c0_59 = arith.constant 0 : index
    %c0_60 = arith.constant 0 : index
    %61 = vector.load %arg2[%c2_57, %c3_58, %c0_59, %c0_60] : memref<26x4x8x128xf32, #tpu.memory_space<vmem>>, vector<1x1x8x128xf32>
    %62 = vector.shape_cast %61 : vector<1x1x8x128xf32> to vector<8x128xf32>
    %63 = math.absf %60 : vector<8x128xf32>
    %64 = arith.mulf %62, %63 : vector<8x128xf32>
    %65 = arith.addf %19, %64 : vector<8x128xf32>
    %c3_61 = arith.constant 3 : index
    %c2_62 = arith.constant 2 : index
    %c0_63 = arith.constant 0 : index
    %c0_64 = arith.constant 0 : index
    %66 = vector.load %arg2[%c3_61, %c2_62, %c0_63, %c0_64] : memref<26x4x8x128xf32, #tpu.memory_space<vmem>>, vector<1x1x8x128xf32>
    %67 = vector.shape_cast %66 : vector<1x1x8x128xf32> to vector<8x128xf32>
    %c3_65 = arith.constant 3 : index
    %c0_66 = arith.constant 0 : index
    %c0_67 = arith.constant 0 : index
    %c0_68 = arith.constant 0 : index
    %68 = vector.load %arg2[%c3_65, %c0_66, %c0_67, %c0_68] : memref<26x4x8x128xf32, #tpu.memory_space<vmem>>, vector<1x1x8x128xf32>
    %69 = vector.shape_cast %68 : vector<1x1x8x128xf32> to vector<8x128xf32>
    %70 = arith.mulf %69, %4 : vector<8x128xf32>
    %71 = arith.addf %67, %70 : vector<8x128xf32>
    %c3_69 = arith.constant 3 : index
    %c1_70 = arith.constant 1 : index
    %c0_71 = arith.constant 0 : index
    %c0_72 = arith.constant 0 : index
    %72 = vector.load %arg2[%c3_69, %c1_70, %c0_71, %c0_72] : memref<26x4x8x128xf32, #tpu.memory_space<vmem>>, vector<1x1x8x128xf32>
    %73 = vector.shape_cast %72 : vector<1x1x8x128xf32> to vector<8x128xf32>
    %74 = arith.mulf %73, %7 : vector<8x128xf32>
    %75 = arith.addf %71, %74 : vector<8x128xf32>
    %c3_73 = arith.constant 3 : index
    %c3_74 = arith.constant 3 : index
    %c0_75 = arith.constant 0 : index
    %c0_76 = arith.constant 0 : index
    %76 = vector.load %arg2[%c3_73, %c3_74, %c0_75, %c0_76] : memref<26x4x8x128xf32, #tpu.memory_space<vmem>>, vector<1x1x8x128xf32>
    %77 = vector.shape_cast %76 : vector<1x1x8x128xf32> to vector<8x128xf32>
    %78 = math.absf %75 : vector<8x128xf32>
    %79 = arith.mulf %77, %78 : vector<8x128xf32>
    %80 = arith.addf %20, %79 : vector<8x128xf32>
    %c4 = arith.constant 4 : index
    %c2_77 = arith.constant 2 : index
    %c0_78 = arith.constant 0 : index
    %c0_79 = arith.constant 0 : index
    %81 = vector.load %arg2[%c4, %c2_77, %c0_78, %c0_79] : memref<26x4x8x128xf32, #tpu.memory_space<vmem>>, vector<1x1x8x128xf32>
    %82 = vector.shape_cast %81 : vector<1x1x8x128xf32> to vector<8x128xf32>
    %c4_80 = arith.constant 4 : index
    %c0_81 = arith.constant 0 : index
    %c0_82 = arith.constant 0 : index
    %c0_83 = arith.constant 0 : index
    %83 = vector.load %arg2[%c4_80, %c0_81, %c0_82, %c0_83] : memref<26x4x8x128xf32, #tpu.memory_space<vmem>>, vector<1x1x8x128xf32>
    %84 = vector.shape_cast %83 : vector<1x1x8x128xf32> to vector<8x128xf32>
    %85 = arith.mulf %84, %4 : vector<8x128xf32>
    %86 = arith.addf %82, %85 : vector<8x128xf32>
    %c4_84 = arith.constant 4 : index
    %c1_85 = arith.constant 1 : index
    %c0_86 = arith.constant 0 : index
    %c0_87 = arith.constant 0 : index
    %87 = vector.load %arg2[%c4_84, %c1_85, %c0_86, %c0_87] : memref<26x4x8x128xf32, #tpu.memory_space<vmem>>, vector<1x1x8x128xf32>
    %88 = vector.shape_cast %87 : vector<1x1x8x128xf32> to vector<8x128xf32>
    %89 = arith.mulf %88, %7 : vector<8x128xf32>
    %90 = arith.addf %86, %89 : vector<8x128xf32>
    %c4_88 = arith.constant 4 : index
    %c3_89 = arith.constant 3 : index
    %c0_90 = arith.constant 0 : index
    %c0_91 = arith.constant 0 : index
    %91 = vector.load %arg2[%c4_88, %c3_89, %c0_90, %c0_91] : memref<26x4x8x128xf32, #tpu.memory_space<vmem>>, vector<1x1x8x128xf32>
    %92 = vector.shape_cast %91 : vector<1x1x8x128xf32> to vector<8x128xf32>
    %93 = math.absf %90 : vector<8x128xf32>
    %94 = arith.mulf %92, %93 : vector<8x128xf32>
    %95 = arith.addf %35, %94 : vector<8x128xf32>
    %c5 = arith.constant 5 : index
    %c2_92 = arith.constant 2 : index
    %c0_93 = arith.constant 0 : index
    %c0_94 = arith.constant 0 : index
    %96 = vector.load %arg2[%c5, %c2_92, %c0_93, %c0_94] : memref<26x4x8x128xf32, #tpu.memory_space<vmem>>, vector<1x1x8x128xf32>
    %97 = vector.shape_cast %96 : vector<1x1x8x128xf32> to vector<8x128xf32>
    %c5_95 = arith.constant 5 : index
    %c0_96 = arith.constant 0 : index
    %c0_97 = arith.constant 0 : index
    %c0_98 = arith.constant 0 : index
    %98 = vector.load %arg2[%c5_95, %c0_96, %c0_97, %c0_98] : memref<26x4x8x128xf32, #tpu.memory_space<vmem>>, vector<1x1x8x128xf32>
    %99 = vector.shape_cast %98 : vector<1x1x8x128xf32> to vector<8x128xf32>
    %100 = arith.mulf %99, %4 : vector<8x128xf32>
    %101 = arith.addf %97, %100 : vector<8x128xf32>
    %c5_99 = arith.constant 5 : index
    %c1_100 = arith.constant 1 : index
    %c0_101 = arith.constant 0 : index
    %c0_102 = arith.constant 0 : index
    %102 = vector.load %arg2[%c5_99, %c1_100, %c0_101, %c0_102] : memref<26x4x8x128xf32, #tpu.memory_space<vmem>>, vector<1x1x8x128xf32>
    %103 = vector.shape_cast %102 : vector<1x1x8x128xf32> to vector<8x128xf32>
    %104 = arith.mulf %103, %7 : vector<8x128xf32>
    %105 = arith.addf %101, %104 : vector<8x128xf32>
    %c5_103 = arith.constant 5 : index
    %c3_104 = arith.constant 3 : index
    %c0_105 = arith.constant 0 : index
    %c0_106 = arith.constant 0 : index
    %106 = vector.load %arg2[%c5_103, %c3_104, %c0_105, %c0_106] : memref<26x4x8x128xf32, #tpu.memory_space<vmem>>, vector<1x1x8x128xf32>
    %107 = vector.shape_cast %106 : vector<1x1x8x128xf32> to vector<8x128xf32>
    %108 = math.absf %105 : vector<8x128xf32>
    %109 = arith.mulf %107, %108 : vector<8x128xf32>
    %110 = arith.addf %50, %109 : vector<8x128xf32>
    %c6 = arith.constant 6 : index
    %c2_107 = arith.constant 2 : index
    %c0_108 = arith.constant 0 : index
    %c0_109 = arith.constant 0 : index
    %111 = vector.load %arg2[%c6, %c2_107, %c0_108, %c0_109] : memref<26x4x8x128xf32, #tpu.memory_space<vmem>>, vector<1x1x8x128xf32>
    %112 = vector.shape_cast %111 : vector<1x1x8x128xf32> to vector<8x128xf32>
    %c6_110 = arith.constant 6 : index
    %c0_111 = arith.constant 0 : index
    %c0_112 = arith.constant 0 : index
    %c0_113 = arith.constant 0 : index
    %113 = vector.load %arg2[%c6_110, %c0_111, %c0_112, %c0_113] : memref<26x4x8x128xf32, #tpu.memory_space<vmem>>, vector<1x1x8x128xf32>
    %114 = vector.shape_cast %113 : vector<1x1x8x128xf32> to vector<8x128xf32>
    %115 = arith.mulf %114, %4 : vector<8x128xf32>
    %116 = arith.addf %112, %115 : vector<8x128xf32>
    %c6_114 = arith.constant 6 : index
    %c1_115 = arith.constant 1 : index
    %c0_116 = arith.constant 0 : index
    %c0_117 = arith.constant 0 : index
    %117 = vector.load %arg2[%c6_114, %c1_115, %c0_116, %c0_117] : memref<26x4x8x128xf32, #tpu.memory_space<vmem>>, vector<1x1x8x128xf32>
    %118 = vector.shape_cast %117 : vector<1x1x8x128xf32> to vector<8x128xf32>
    %119 = arith.mulf %118, %7 : vector<8x128xf32>
    %120 = arith.addf %116, %119 : vector<8x128xf32>
    %c6_118 = arith.constant 6 : index
    %c3_119 = arith.constant 3 : index
    %c0_120 = arith.constant 0 : index
    %c0_121 = arith.constant 0 : index
    %121 = vector.load %arg2[%c6_118, %c3_119, %c0_120, %c0_121] : memref<26x4x8x128xf32, #tpu.memory_space<vmem>>, vector<1x1x8x128xf32>
    %122 = vector.shape_cast %121 : vector<1x1x8x128xf32> to vector<8x128xf32>
    %123 = math.absf %120 : vector<8x128xf32>
    %124 = arith.mulf %122, %123 : vector<8x128xf32>
    %125 = arith.addf %65, %124 : vector<8x128xf32>
    %c7 = arith.constant 7 : index
    %c2_122 = arith.constant 2 : index
    %c0_123 = arith.constant 0 : index
    %c0_124 = arith.constant 0 : index
    %126 = vector.load %arg2[%c7, %c2_122, %c0_123, %c0_124] : memref<26x4x8x128xf32, #tpu.memory_space<vmem>>, vector<1x1x8x128xf32>
    %127 = vector.shape_cast %126 : vector<1x1x8x128xf32> to vector<8x128xf32>
    %c7_125 = arith.constant 7 : index
    %c0_126 = arith.constant 0 : index
    %c0_127 = arith.constant 0 : index
    %c0_128 = arith.constant 0 : index
    %128 = vector.load %arg2[%c7_125, %c0_126, %c0_127, %c0_128] : memref<26x4x8x128xf32, #tpu.memory_space<vmem>>, vector<1x1x8x128xf32>
    %129 = vector.shape_cast %128 : vector<1x1x8x128xf32> to vector<8x128xf32>
    %130 = arith.mulf %129, %4 : vector<8x128xf32>
    %131 = arith.addf %127, %130 : vector<8x128xf32>
    %c7_129 = arith.constant 7 : index
    %c1_130 = arith.constant 1 : index
    %c0_131 = arith.constant 0 : index
    %c0_132 = arith.constant 0 : index
    %132 = vector.load %arg2[%c7_129, %c1_130, %c0_131, %c0_132] : memref<26x4x8x128xf32, #tpu.memory_space<vmem>>, vector<1x1x8x128xf32>
    %133 = vector.shape_cast %132 : vector<1x1x8x128xf32> to vector<8x128xf32>
    %134 = arith.mulf %133, %7 : vector<8x128xf32>
    %135 = arith.addf %131, %134 : vector<8x128xf32>
    %c7_133 = arith.constant 7 : index
    %c3_134 = arith.constant 3 : index
    %c0_135 = arith.constant 0 : index
    %c0_136 = arith.constant 0 : index
    %136 = vector.load %arg2[%c7_133, %c3_134, %c0_135, %c0_136] : memref<26x4x8x128xf32, #tpu.memory_space<vmem>>, vector<1x1x8x128xf32>
    %137 = vector.shape_cast %136 : vector<1x1x8x128xf32> to vector<8x128xf32>
    %138 = math.absf %135 : vector<8x128xf32>
    %139 = arith.mulf %137, %138 : vector<8x128xf32>
    %140 = arith.addf %80, %139 : vector<8x128xf32>
    %c8 = arith.constant 8 : index
    %c2_137 = arith.constant 2 : index
    %c0_138 = arith.constant 0 : index
    %c0_139 = arith.constant 0 : index
    %141 = vector.load %arg2[%c8, %c2_137, %c0_138, %c0_139] : memref<26x4x8x128xf32, #tpu.memory_space<vmem>>, vector<1x1x8x128xf32>
    %142 = vector.shape_cast %141 : vector<1x1x8x128xf32> to vector<8x128xf32>
    %c8_140 = arith.constant 8 : index
    %c0_141 = arith.constant 0 : index
    %c0_142 = arith.constant 0 : index
    %c0_143 = arith.constant 0 : index
    %143 = vector.load %arg2[%c8_140, %c0_141, %c0_142, %c0_143] : memref<26x4x8x128xf32, #tpu.memory_space<vmem>>, vector<1x1x8x128xf32>
    %144 = vector.shape_cast %143 : vector<1x1x8x128xf32> to vector<8x128xf32>
    %145 = arith.mulf %144, %4 : vector<8x128xf32>
    %146 = arith.addf %142, %145 : vector<8x128xf32>
    %c8_144 = arith.constant 8 : index
    %c1_145 = arith.constant 1 : index
    %c0_146 = arith.constant 0 : index
    %c0_147 = arith.constant 0 : index
    %147 = vector.load %arg2[%c8_144, %c1_145, %c0_146, %c0_147] : memref<26x4x8x128xf32, #tpu.memory_space<vmem>>, vector<1x1x8x128xf32>
    %148 = vector.shape_cast %147 : vector<1x1x8x128xf32> to vector<8x128xf32>
    %149 = arith.mulf %148, %7 : vector<8x128xf32>
    %150 = arith.addf %146, %149 : vector<8x128xf32>
    %c8_148 = arith.constant 8 : index
    %c3_149 = arith.constant 3 : index
    %c0_150 = arith.constant 0 : index
    %c0_151 = arith.constant 0 : index
    %151 = vector.load %arg2[%c8_148, %c3_149, %c0_150, %c0_151] : memref<26x4x8x128xf32, #tpu.memory_space<vmem>>, vector<1x1x8x128xf32>
    %152 = vector.shape_cast %151 : vector<1x1x8x128xf32> to vector<8x128xf32>
    %153 = math.absf %150 : vector<8x128xf32>
    %154 = arith.mulf %152, %153 : vector<8x128xf32>
    %155 = arith.addf %95, %154 : vector<8x128xf32>
    %c9 = arith.constant 9 : index
    %c2_152 = arith.constant 2 : index
    %c0_153 = arith.constant 0 : index
    %c0_154 = arith.constant 0 : index
    %156 = vector.load %arg2[%c9, %c2_152, %c0_153, %c0_154] : memref<26x4x8x128xf32, #tpu.memory_space<vmem>>, vector<1x1x8x128xf32>
    %157 = vector.shape_cast %156 : vector<1x1x8x128xf32> to vector<8x128xf32>
    %c9_155 = arith.constant 9 : index
    %c0_156 = arith.constant 0 : index
    %c0_157 = arith.constant 0 : index
    %c0_158 = arith.constant 0 : index
    %158 = vector.load %arg2[%c9_155, %c0_156, %c0_157, %c0_158] : memref<26x4x8x128xf32, #tpu.memory_space<vmem>>, vector<1x1x8x128xf32>
    %159 = vector.shape_cast %158 : vector<1x1x8x128xf32> to vector<8x128xf32>
    %160 = arith.mulf %159, %4 : vector<8x128xf32>
    %161 = arith.addf %157, %160 : vector<8x128xf32>
    %c9_159 = arith.constant 9 : index
    %c1_160 = arith.constant 1 : index
    %c0_161 = arith.constant 0 : index
    %c0_162 = arith.constant 0 : index
    %162 = vector.load %arg2[%c9_159, %c1_160, %c0_161, %c0_162] : memref<26x4x8x128xf32, #tpu.memory_space<vmem>>, vector<1x1x8x128xf32>
    %163 = vector.shape_cast %162 : vector<1x1x8x128xf32> to vector<8x128xf32>
    %164 = arith.mulf %163, %7 : vector<8x128xf32>
    %165 = arith.addf %161, %164 : vector<8x128xf32>
    %c9_163 = arith.constant 9 : index
    %c3_164 = arith.constant 3 : index
    %c0_165 = arith.constant 0 : index
    %c0_166 = arith.constant 0 : index
    %166 = vector.load %arg2[%c9_163, %c3_164, %c0_165, %c0_166] : memref<26x4x8x128xf32, #tpu.memory_space<vmem>>, vector<1x1x8x128xf32>
    %167 = vector.shape_cast %166 : vector<1x1x8x128xf32> to vector<8x128xf32>
    %168 = math.absf %165 : vector<8x128xf32>
    %169 = arith.mulf %167, %168 : vector<8x128xf32>
    %170 = arith.addf %110, %169 : vector<8x128xf32>
    %c10 = arith.constant 10 : index
    %c2_167 = arith.constant 2 : index
    %c0_168 = arith.constant 0 : index
    %c0_169 = arith.constant 0 : index
    %171 = vector.load %arg2[%c10, %c2_167, %c0_168, %c0_169] : memref<26x4x8x128xf32, #tpu.memory_space<vmem>>, vector<1x1x8x128xf32>
    %172 = vector.shape_cast %171 : vector<1x1x8x128xf32> to vector<8x128xf32>
    %c10_170 = arith.constant 10 : index
    %c0_171 = arith.constant 0 : index
    %c0_172 = arith.constant 0 : index
    %c0_173 = arith.constant 0 : index
    %173 = vector.load %arg2[%c10_170, %c0_171, %c0_172, %c0_173] : memref<26x4x8x128xf32, #tpu.memory_space<vmem>>, vector<1x1x8x128xf32>
    %174 = vector.shape_cast %173 : vector<1x1x8x128xf32> to vector<8x128xf32>
    %175 = arith.mulf %174, %4 : vector<8x128xf32>
    %176 = arith.addf %172, %175 : vector<8x128xf32>
    %c10_174 = arith.constant 10 : index
    %c1_175 = arith.constant 1 : index
    %c0_176 = arith.constant 0 : index
    %c0_177 = arith.constant 0 : index
    %177 = vector.load %arg2[%c10_174, %c1_175, %c0_176, %c0_177] : memref<26x4x8x128xf32, #tpu.memory_space<vmem>>, vector<1x1x8x128xf32>
    %178 = vector.shape_cast %177 : vector<1x1x8x128xf32> to vector<8x128xf32>
    %179 = arith.mulf %178, %7 : vector<8x128xf32>
    %180 = arith.addf %176, %179 : vector<8x128xf32>
    %c10_178 = arith.constant 10 : index
    %c3_179 = arith.constant 3 : index
    %c0_180 = arith.constant 0 : index
    %c0_181 = arith.constant 0 : index
    %181 = vector.load %arg2[%c10_178, %c3_179, %c0_180, %c0_181] : memref<26x4x8x128xf32, #tpu.memory_space<vmem>>, vector<1x1x8x128xf32>
    %182 = vector.shape_cast %181 : vector<1x1x8x128xf32> to vector<8x128xf32>
    %183 = math.absf %180 : vector<8x128xf32>
    %184 = arith.mulf %182, %183 : vector<8x128xf32>
    %185 = arith.addf %125, %184 : vector<8x128xf32>
    %c11 = arith.constant 11 : index
    %c2_182 = arith.constant 2 : index
    %c0_183 = arith.constant 0 : index
    %c0_184 = arith.constant 0 : index
    %186 = vector.load %arg2[%c11, %c2_182, %c0_183, %c0_184] : memref<26x4x8x128xf32, #tpu.memory_space<vmem>>, vector<1x1x8x128xf32>
    %187 = vector.shape_cast %186 : vector<1x1x8x128xf32> to vector<8x128xf32>
    %c11_185 = arith.constant 11 : index
    %c0_186 = arith.constant 0 : index
    %c0_187 = arith.constant 0 : index
    %c0_188 = arith.constant 0 : index
    %188 = vector.load %arg2[%c11_185, %c0_186, %c0_187, %c0_188] : memref<26x4x8x128xf32, #tpu.memory_space<vmem>>, vector<1x1x8x128xf32>
    %189 = vector.shape_cast %188 : vector<1x1x8x128xf32> to vector<8x128xf32>
    %190 = arith.mulf %189, %4 : vector<8x128xf32>
    %191 = arith.addf %187, %190 : vector<8x128xf32>
    %c11_189 = arith.constant 11 : index
    %c1_190 = arith.constant 1 : index
    %c0_191 = arith.constant 0 : index
    %c0_192 = arith.constant 0 : index
    %192 = vector.load %arg2[%c11_189, %c1_190, %c0_191, %c0_192] : memref<26x4x8x128xf32, #tpu.memory_space<vmem>>, vector<1x1x8x128xf32>
    %193 = vector.shape_cast %192 : vector<1x1x8x128xf32> to vector<8x128xf32>
    %194 = arith.mulf %193, %7 : vector<8x128xf32>
    %195 = arith.addf %191, %194 : vector<8x128xf32>
    %c11_193 = arith.constant 11 : index
    %c3_194 = arith.constant 3 : index
    %c0_195 = arith.constant 0 : index
    %c0_196 = arith.constant 0 : index
    %196 = vector.load %arg2[%c11_193, %c3_194, %c0_195, %c0_196] : memref<26x4x8x128xf32, #tpu.memory_space<vmem>>, vector<1x1x8x128xf32>
    %197 = vector.shape_cast %196 : vector<1x1x8x128xf32> to vector<8x128xf32>
    %198 = math.absf %195 : vector<8x128xf32>
    %199 = arith.mulf %197, %198 : vector<8x128xf32>
    %200 = arith.addf %140, %199 : vector<8x128xf32>
    %c12 = arith.constant 12 : index
    %c2_197 = arith.constant 2 : index
    %c0_198 = arith.constant 0 : index
    %c0_199 = arith.constant 0 : index
    %201 = vector.load %arg2[%c12, %c2_197, %c0_198, %c0_199] : memref<26x4x8x128xf32, #tpu.memory_space<vmem>>, vector<1x1x8x128xf32>
    %202 = vector.shape_cast %201 : vector<1x1x8x128xf32> to vector<8x128xf32>
    %c12_200 = arith.constant 12 : index
    %c0_201 = arith.constant 0 : index
    %c0_202 = arith.constant 0 : index
    %c0_203 = arith.constant 0 : index
    %203 = vector.load %arg2[%c12_200, %c0_201, %c0_202, %c0_203] : memref<26x4x8x128xf32, #tpu.memory_space<vmem>>, vector<1x1x8x128xf32>
    %204 = vector.shape_cast %203 : vector<1x1x8x128xf32> to vector<8x128xf32>
    %205 = arith.mulf %204, %4 : vector<8x128xf32>
    %206 = arith.addf %202, %205 : vector<8x128xf32>
    %c12_204 = arith.constant 12 : index
    %c1_205 = arith.constant 1 : index
    %c0_206 = arith.constant 0 : index
    %c0_207 = arith.constant 0 : index
    %207 = vector.load %arg2[%c12_204, %c1_205, %c0_206, %c0_207] : memref<26x4x8x128xf32, #tpu.memory_space<vmem>>, vector<1x1x8x128xf32>
    %208 = vector.shape_cast %207 : vector<1x1x8x128xf32> to vector<8x128xf32>
    %209 = arith.mulf %208, %7 : vector<8x128xf32>
    %210 = arith.addf %206, %209 : vector<8x128xf32>
    %c12_208 = arith.constant 12 : index
    %c3_209 = arith.constant 3 : index
    %c0_210 = arith.constant 0 : index
    %c0_211 = arith.constant 0 : index
    %211 = vector.load %arg2[%c12_208, %c3_209, %c0_210, %c0_211] : memref<26x4x8x128xf32, #tpu.memory_space<vmem>>, vector<1x1x8x128xf32>
    %212 = vector.shape_cast %211 : vector<1x1x8x128xf32> to vector<8x128xf32>
    %213 = math.absf %210 : vector<8x128xf32>
    %214 = arith.mulf %212, %213 : vector<8x128xf32>
    %215 = arith.addf %155, %214 : vector<8x128xf32>
    %c13 = arith.constant 13 : index
    %c2_212 = arith.constant 2 : index
    %c0_213 = arith.constant 0 : index
    %c0_214 = arith.constant 0 : index
    %216 = vector.load %arg2[%c13, %c2_212, %c0_213, %c0_214] : memref<26x4x8x128xf32, #tpu.memory_space<vmem>>, vector<1x1x8x128xf32>
    %217 = vector.shape_cast %216 : vector<1x1x8x128xf32> to vector<8x128xf32>
    %c13_215 = arith.constant 13 : index
    %c0_216 = arith.constant 0 : index
    %c0_217 = arith.constant 0 : index
    %c0_218 = arith.constant 0 : index
    %218 = vector.load %arg2[%c13_215, %c0_216, %c0_217, %c0_218] : memref<26x4x8x128xf32, #tpu.memory_space<vmem>>, vector<1x1x8x128xf32>
    %219 = vector.shape_cast %218 : vector<1x1x8x128xf32> to vector<8x128xf32>
    %220 = arith.mulf %219, %4 : vector<8x128xf32>
    %221 = arith.addf %217, %220 : vector<8x128xf32>
    %c13_219 = arith.constant 13 : index
    %c1_220 = arith.constant 1 : index
    %c0_221 = arith.constant 0 : index
    %c0_222 = arith.constant 0 : index
    %222 = vector.load %arg2[%c13_219, %c1_220, %c0_221, %c0_222] : memref<26x4x8x128xf32, #tpu.memory_space<vmem>>, vector<1x1x8x128xf32>
    %223 = vector.shape_cast %222 : vector<1x1x8x128xf32> to vector<8x128xf32>
    %224 = arith.mulf %223, %7 : vector<8x128xf32>
    %225 = arith.addf %221, %224 : vector<8x128xf32>
    %c13_223 = arith.constant 13 : index
    %c3_224 = arith.constant 3 : index
    %c0_225 = arith.constant 0 : index
    %c0_226 = arith.constant 0 : index
    %226 = vector.load %arg2[%c13_223, %c3_224, %c0_225, %c0_226] : memref<26x4x8x128xf32, #tpu.memory_space<vmem>>, vector<1x1x8x128xf32>
    %227 = vector.shape_cast %226 : vector<1x1x8x128xf32> to vector<8x128xf32>
    %228 = math.absf %225 : vector<8x128xf32>
    %229 = arith.mulf %227, %228 : vector<8x128xf32>
    %230 = arith.addf %170, %229 : vector<8x128xf32>
    %c14 = arith.constant 14 : index
    %c2_227 = arith.constant 2 : index
    %c0_228 = arith.constant 0 : index
    %c0_229 = arith.constant 0 : index
    %231 = vector.load %arg2[%c14, %c2_227, %c0_228, %c0_229] : memref<26x4x8x128xf32, #tpu.memory_space<vmem>>, vector<1x1x8x128xf32>
    %232 = vector.shape_cast %231 : vector<1x1x8x128xf32> to vector<8x128xf32>
    %c14_230 = arith.constant 14 : index
    %c0_231 = arith.constant 0 : index
    %c0_232 = arith.constant 0 : index
    %c0_233 = arith.constant 0 : index
    %233 = vector.load %arg2[%c14_230, %c0_231, %c0_232, %c0_233] : memref<26x4x8x128xf32, #tpu.memory_space<vmem>>, vector<1x1x8x128xf32>
    %234 = vector.shape_cast %233 : vector<1x1x8x128xf32> to vector<8x128xf32>
    %235 = arith.mulf %234, %4 : vector<8x128xf32>
    %236 = arith.addf %232, %235 : vector<8x128xf32>
    %c14_234 = arith.constant 14 : index
    %c1_235 = arith.constant 1 : index
    %c0_236 = arith.constant 0 : index
    %c0_237 = arith.constant 0 : index
    %237 = vector.load %arg2[%c14_234, %c1_235, %c0_236, %c0_237] : memref<26x4x8x128xf32, #tpu.memory_space<vmem>>, vector<1x1x8x128xf32>
    %238 = vector.shape_cast %237 : vector<1x1x8x128xf32> to vector<8x128xf32>
    %239 = arith.mulf %238, %7 : vector<8x128xf32>
    %240 = arith.addf %236, %239 : vector<8x128xf32>
    %c14_238 = arith.constant 14 : index
    %c3_239 = arith.constant 3 : index
    %c0_240 = arith.constant 0 : index
    %c0_241 = arith.constant 0 : index
    %241 = vector.load %arg2[%c14_238, %c3_239, %c0_240, %c0_241] : memref<26x4x8x128xf32, #tpu.memory_space<vmem>>, vector<1x1x8x128xf32>
    %242 = vector.shape_cast %241 : vector<1x1x8x128xf32> to vector<8x128xf32>
    %243 = math.absf %240 : vector<8x128xf32>
    %244 = arith.mulf %242, %243 : vector<8x128xf32>
    %245 = arith.addf %185, %244 : vector<8x128xf32>
    %c15 = arith.constant 15 : index
    %c2_242 = arith.constant 2 : index
    %c0_243 = arith.constant 0 : index
    %c0_244 = arith.constant 0 : index
    %246 = vector.load %arg2[%c15, %c2_242, %c0_243, %c0_244] : memref<26x4x8x128xf32, #tpu.memory_space<vmem>>, vector<1x1x8x128xf32>
    %247 = vector.shape_cast %246 : vector<1x1x8x128xf32> to vector<8x128xf32>
    %c15_245 = arith.constant 15 : index
    %c0_246 = arith.constant 0 : index
    %c0_247 = arith.constant 0 : index
    %c0_248 = arith.constant 0 : index
    %248 = vector.load %arg2[%c15_245, %c0_246, %c0_247, %c0_248] : memref<26x4x8x128xf32, #tpu.memory_space<vmem>>, vector<1x1x8x128xf32>
    %249 = vector.shape_cast %248 : vector<1x1x8x128xf32> to vector<8x128xf32>
    %250 = arith.mulf %249, %4 : vector<8x128xf32>
    %251 = arith.addf %247, %250 : vector<8x128xf32>
    %c15_249 = arith.constant 15 : index
    %c1_250 = arith.constant 1 : index
    %c0_251 = arith.constant 0 : index
    %c0_252 = arith.constant 0 : index
    %252 = vector.load %arg2[%c15_249, %c1_250, %c0_251, %c0_252] : memref<26x4x8x128xf32, #tpu.memory_space<vmem>>, vector<1x1x8x128xf32>
    %253 = vector.shape_cast %252 : vector<1x1x8x128xf32> to vector<8x128xf32>
    %254 = arith.mulf %253, %7 : vector<8x128xf32>
    %255 = arith.addf %251, %254 : vector<8x128xf32>
    %c15_253 = arith.constant 15 : index
    %c3_254 = arith.constant 3 : index
    %c0_255 = arith.constant 0 : index
    %c0_256 = arith.constant 0 : index
    %256 = vector.load %arg2[%c15_253, %c3_254, %c0_255, %c0_256] : memref<26x4x8x128xf32, #tpu.memory_space<vmem>>, vector<1x1x8x128xf32>
    %257 = vector.shape_cast %256 : vector<1x1x8x128xf32> to vector<8x128xf32>
    %258 = math.absf %255 : vector<8x128xf32>
    %259 = arith.mulf %257, %258 : vector<8x128xf32>
    %260 = arith.addf %200, %259 : vector<8x128xf32>
    %c16 = arith.constant 16 : index
    %c2_257 = arith.constant 2 : index
    %c0_258 = arith.constant 0 : index
    %c0_259 = arith.constant 0 : index
    %261 = vector.load %arg2[%c16, %c2_257, %c0_258, %c0_259] : memref<26x4x8x128xf32, #tpu.memory_space<vmem>>, vector<1x1x8x128xf32>
    %262 = vector.shape_cast %261 : vector<1x1x8x128xf32> to vector<8x128xf32>
    %c16_260 = arith.constant 16 : index
    %c0_261 = arith.constant 0 : index
    %c0_262 = arith.constant 0 : index
    %c0_263 = arith.constant 0 : index
    %263 = vector.load %arg2[%c16_260, %c0_261, %c0_262, %c0_263] : memref<26x4x8x128xf32, #tpu.memory_space<vmem>>, vector<1x1x8x128xf32>
    %264 = vector.shape_cast %263 : vector<1x1x8x128xf32> to vector<8x128xf32>
    %265 = arith.mulf %264, %4 : vector<8x128xf32>
    %266 = arith.addf %262, %265 : vector<8x128xf32>
    %c16_264 = arith.constant 16 : index
    %c1_265 = arith.constant 1 : index
    %c0_266 = arith.constant 0 : index
    %c0_267 = arith.constant 0 : index
    %267 = vector.load %arg2[%c16_264, %c1_265, %c0_266, %c0_267] : memref<26x4x8x128xf32, #tpu.memory_space<vmem>>, vector<1x1x8x128xf32>
    %268 = vector.shape_cast %267 : vector<1x1x8x128xf32> to vector<8x128xf32>
    %269 = arith.mulf %268, %7 : vector<8x128xf32>
    %270 = arith.addf %266, %269 : vector<8x128xf32>
    %c16_268 = arith.constant 16 : index
    %c3_269 = arith.constant 3 : index
    %c0_270 = arith.constant 0 : index
    %c0_271 = arith.constant 0 : index
    %271 = vector.load %arg2[%c16_268, %c3_269, %c0_270, %c0_271] : memref<26x4x8x128xf32, #tpu.memory_space<vmem>>, vector<1x1x8x128xf32>
    %272 = vector.shape_cast %271 : vector<1x1x8x128xf32> to vector<8x128xf32>
    %273 = math.absf %270 : vector<8x128xf32>
    %274 = arith.mulf %272, %273 : vector<8x128xf32>
    %275 = arith.addf %215, %274 : vector<8x128xf32>
    %c17 = arith.constant 17 : index
    %c2_272 = arith.constant 2 : index
    %c0_273 = arith.constant 0 : index
    %c0_274 = arith.constant 0 : index
    %276 = vector.load %arg2[%c17, %c2_272, %c0_273, %c0_274] : memref<26x4x8x128xf32, #tpu.memory_space<vmem>>, vector<1x1x8x128xf32>
    %277 = vector.shape_cast %276 : vector<1x1x8x128xf32> to vector<8x128xf32>
    %c17_275 = arith.constant 17 : index
    %c0_276 = arith.constant 0 : index
    %c0_277 = arith.constant 0 : index
    %c0_278 = arith.constant 0 : index
    %278 = vector.load %arg2[%c17_275, %c0_276, %c0_277, %c0_278] : memref<26x4x8x128xf32, #tpu.memory_space<vmem>>, vector<1x1x8x128xf32>
    %279 = vector.shape_cast %278 : vector<1x1x8x128xf32> to vector<8x128xf32>
    %280 = arith.mulf %279, %4 : vector<8x128xf32>
    %281 = arith.addf %277, %280 : vector<8x128xf32>
    %c17_279 = arith.constant 17 : index
    %c1_280 = arith.constant 1 : index
    %c0_281 = arith.constant 0 : index
    %c0_282 = arith.constant 0 : index
    %282 = vector.load %arg2[%c17_279, %c1_280, %c0_281, %c0_282] : memref<26x4x8x128xf32, #tpu.memory_space<vmem>>, vector<1x1x8x128xf32>
    %283 = vector.shape_cast %282 : vector<1x1x8x128xf32> to vector<8x128xf32>
    %284 = arith.mulf %283, %7 : vector<8x128xf32>
    %285 = arith.addf %281, %284 : vector<8x128xf32>
    %c17_283 = arith.constant 17 : index
    %c3_284 = arith.constant 3 : index
    %c0_285 = arith.constant 0 : index
    %c0_286 = arith.constant 0 : index
    %286 = vector.load %arg2[%c17_283, %c3_284, %c0_285, %c0_286] : memref<26x4x8x128xf32, #tpu.memory_space<vmem>>, vector<1x1x8x128xf32>
    %287 = vector.shape_cast %286 : vector<1x1x8x128xf32> to vector<8x128xf32>
    %288 = math.absf %285 : vector<8x128xf32>
    %289 = arith.mulf %287, %288 : vector<8x128xf32>
    %290 = arith.addf %230, %289 : vector<8x128xf32>
    %c18 = arith.constant 18 : index
    %c2_287 = arith.constant 2 : index
    %c0_288 = arith.constant 0 : index
    %c0_289 = arith.constant 0 : index
    %291 = vector.load %arg2[%c18, %c2_287, %c0_288, %c0_289] : memref<26x4x8x128xf32, #tpu.memory_space<vmem>>, vector<1x1x8x128xf32>
    %292 = vector.shape_cast %291 : vector<1x1x8x128xf32> to vector<8x128xf32>
    %c18_290 = arith.constant 18 : index
    %c0_291 = arith.constant 0 : index
    %c0_292 = arith.constant 0 : index
    %c0_293 = arith.constant 0 : index
    %293 = vector.load %arg2[%c18_290, %c0_291, %c0_292, %c0_293] : memref<26x4x8x128xf32, #tpu.memory_space<vmem>>, vector<1x1x8x128xf32>
    %294 = vector.shape_cast %293 : vector<1x1x8x128xf32> to vector<8x128xf32>
    %295 = arith.mulf %294, %4 : vector<8x128xf32>
    %296 = arith.addf %292, %295 : vector<8x128xf32>
    %c18_294 = arith.constant 18 : index
    %c1_295 = arith.constant 1 : index
    %c0_296 = arith.constant 0 : index
    %c0_297 = arith.constant 0 : index
    %297 = vector.load %arg2[%c18_294, %c1_295, %c0_296, %c0_297] : memref<26x4x8x128xf32, #tpu.memory_space<vmem>>, vector<1x1x8x128xf32>
    %298 = vector.shape_cast %297 : vector<1x1x8x128xf32> to vector<8x128xf32>
    %299 = arith.mulf %298, %7 : vector<8x128xf32>
    %300 = arith.addf %296, %299 : vector<8x128xf32>
    %c18_298 = arith.constant 18 : index
    %c3_299 = arith.constant 3 : index
    %c0_300 = arith.constant 0 : index
    %c0_301 = arith.constant 0 : index
    %301 = vector.load %arg2[%c18_298, %c3_299, %c0_300, %c0_301] : memref<26x4x8x128xf32, #tpu.memory_space<vmem>>, vector<1x1x8x128xf32>
    %302 = vector.shape_cast %301 : vector<1x1x8x128xf32> to vector<8x128xf32>
    %303 = math.absf %300 : vector<8x128xf32>
    %304 = arith.mulf %302, %303 : vector<8x128xf32>
    %305 = arith.addf %245, %304 : vector<8x128xf32>
    %c19 = arith.constant 19 : index
    %c2_302 = arith.constant 2 : index
    %c0_303 = arith.constant 0 : index
    %c0_304 = arith.constant 0 : index
    %306 = vector.load %arg2[%c19, %c2_302, %c0_303, %c0_304] : memref<26x4x8x128xf32, #tpu.memory_space<vmem>>, vector<1x1x8x128xf32>
    %307 = vector.shape_cast %306 : vector<1x1x8x128xf32> to vector<8x128xf32>
    %c19_305 = arith.constant 19 : index
    %c0_306 = arith.constant 0 : index
    %c0_307 = arith.constant 0 : index
    %c0_308 = arith.constant 0 : index
    %308 = vector.load %arg2[%c19_305, %c0_306, %c0_307, %c0_308] : memref<26x4x8x128xf32, #tpu.memory_space<vmem>>, vector<1x1x8x128xf32>
    %309 = vector.shape_cast %308 : vector<1x1x8x128xf32> to vector<8x128xf32>
    %310 = arith.mulf %309, %4 : vector<8x128xf32>
    %311 = arith.addf %307, %310 : vector<8x128xf32>
    %c19_309 = arith.constant 19 : index
    %c1_310 = arith.constant 1 : index
    %c0_311 = arith.constant 0 : index
    %c0_312 = arith.constant 0 : index
    %312 = vector.load %arg2[%c19_309, %c1_310, %c0_311, %c0_312] : memref<26x4x8x128xf32, #tpu.memory_space<vmem>>, vector<1x1x8x128xf32>
    %313 = vector.shape_cast %312 : vector<1x1x8x128xf32> to vector<8x128xf32>
    %314 = arith.mulf %313, %7 : vector<8x128xf32>
    %315 = arith.addf %311, %314 : vector<8x128xf32>
    %c19_313 = arith.constant 19 : index
    %c3_314 = arith.constant 3 : index
    %c0_315 = arith.constant 0 : index
    %c0_316 = arith.constant 0 : index
    %316 = vector.load %arg2[%c19_313, %c3_314, %c0_315, %c0_316] : memref<26x4x8x128xf32, #tpu.memory_space<vmem>>, vector<1x1x8x128xf32>
    %317 = vector.shape_cast %316 : vector<1x1x8x128xf32> to vector<8x128xf32>
    %318 = math.absf %315 : vector<8x128xf32>
    %319 = arith.mulf %317, %318 : vector<8x128xf32>
    %320 = arith.addf %260, %319 : vector<8x128xf32>
    %c20 = arith.constant 20 : index
    %c2_317 = arith.constant 2 : index
    %c0_318 = arith.constant 0 : index
    %c0_319 = arith.constant 0 : index
    %321 = vector.load %arg2[%c20, %c2_317, %c0_318, %c0_319] : memref<26x4x8x128xf32, #tpu.memory_space<vmem>>, vector<1x1x8x128xf32>
    %322 = vector.shape_cast %321 : vector<1x1x8x128xf32> to vector<8x128xf32>
    %c20_320 = arith.constant 20 : index
    %c0_321 = arith.constant 0 : index
    %c0_322 = arith.constant 0 : index
    %c0_323 = arith.constant 0 : index
    %323 = vector.load %arg2[%c20_320, %c0_321, %c0_322, %c0_323] : memref<26x4x8x128xf32, #tpu.memory_space<vmem>>, vector<1x1x8x128xf32>
    %324 = vector.shape_cast %323 : vector<1x1x8x128xf32> to vector<8x128xf32>
    %325 = arith.mulf %324, %4 : vector<8x128xf32>
    %326 = arith.addf %322, %325 : vector<8x128xf32>
    %c20_324 = arith.constant 20 : index
    %c1_325 = arith.constant 1 : index
    %c0_326 = arith.constant 0 : index
    %c0_327 = arith.constant 0 : index
    %327 = vector.load %arg2[%c20_324, %c1_325, %c0_326, %c0_327] : memref<26x4x8x128xf32, #tpu.memory_space<vmem>>, vector<1x1x8x128xf32>
    %328 = vector.shape_cast %327 : vector<1x1x8x128xf32> to vector<8x128xf32>
    %329 = arith.mulf %328, %7 : vector<8x128xf32>
    %330 = arith.addf %326, %329 : vector<8x128xf32>
    %c20_328 = arith.constant 20 : index
    %c3_329 = arith.constant 3 : index
    %c0_330 = arith.constant 0 : index
    %c0_331 = arith.constant 0 : index
    %331 = vector.load %arg2[%c20_328, %c3_329, %c0_330, %c0_331] : memref<26x4x8x128xf32, #tpu.memory_space<vmem>>, vector<1x1x8x128xf32>
    %332 = vector.shape_cast %331 : vector<1x1x8x128xf32> to vector<8x128xf32>
    %333 = math.absf %330 : vector<8x128xf32>
    %334 = arith.mulf %332, %333 : vector<8x128xf32>
    %335 = arith.addf %275, %334 : vector<8x128xf32>
    %c21 = arith.constant 21 : index
    %c2_332 = arith.constant 2 : index
    %c0_333 = arith.constant 0 : index
    %c0_334 = arith.constant 0 : index
    %336 = vector.load %arg2[%c21, %c2_332, %c0_333, %c0_334] : memref<26x4x8x128xf32, #tpu.memory_space<vmem>>, vector<1x1x8x128xf32>
    %337 = vector.shape_cast %336 : vector<1x1x8x128xf32> to vector<8x128xf32>
    %c21_335 = arith.constant 21 : index
    %c0_336 = arith.constant 0 : index
    %c0_337 = arith.constant 0 : index
    %c0_338 = arith.constant 0 : index
    %338 = vector.load %arg2[%c21_335, %c0_336, %c0_337, %c0_338] : memref<26x4x8x128xf32, #tpu.memory_space<vmem>>, vector<1x1x8x128xf32>
    %339 = vector.shape_cast %338 : vector<1x1x8x128xf32> to vector<8x128xf32>
    %340 = arith.mulf %339, %4 : vector<8x128xf32>
    %341 = arith.addf %337, %340 : vector<8x128xf32>
    %c21_339 = arith.constant 21 : index
    %c1_340 = arith.constant 1 : index
    %c0_341 = arith.constant 0 : index
    %c0_342 = arith.constant 0 : index
    %342 = vector.load %arg2[%c21_339, %c1_340, %c0_341, %c0_342] : memref<26x4x8x128xf32, #tpu.memory_space<vmem>>, vector<1x1x8x128xf32>
    %343 = vector.shape_cast %342 : vector<1x1x8x128xf32> to vector<8x128xf32>
    %344 = arith.mulf %343, %7 : vector<8x128xf32>
    %345 = arith.addf %341, %344 : vector<8x128xf32>
    %c21_343 = arith.constant 21 : index
    %c3_344 = arith.constant 3 : index
    %c0_345 = arith.constant 0 : index
    %c0_346 = arith.constant 0 : index
    %346 = vector.load %arg2[%c21_343, %c3_344, %c0_345, %c0_346] : memref<26x4x8x128xf32, #tpu.memory_space<vmem>>, vector<1x1x8x128xf32>
    %347 = vector.shape_cast %346 : vector<1x1x8x128xf32> to vector<8x128xf32>
    %348 = math.absf %345 : vector<8x128xf32>
    %349 = arith.mulf %347, %348 : vector<8x128xf32>
    %350 = arith.addf %290, %349 : vector<8x128xf32>
    %c22 = arith.constant 22 : index
    %c2_347 = arith.constant 2 : index
    %c0_348 = arith.constant 0 : index
    %c0_349 = arith.constant 0 : index
    %351 = vector.load %arg2[%c22, %c2_347, %c0_348, %c0_349] : memref<26x4x8x128xf32, #tpu.memory_space<vmem>>, vector<1x1x8x128xf32>
    %352 = vector.shape_cast %351 : vector<1x1x8x128xf32> to vector<8x128xf32>
    %c22_350 = arith.constant 22 : index
    %c0_351 = arith.constant 0 : index
    %c0_352 = arith.constant 0 : index
    %c0_353 = arith.constant 0 : index
    %353 = vector.load %arg2[%c22_350, %c0_351, %c0_352, %c0_353] : memref<26x4x8x128xf32, #tpu.memory_space<vmem>>, vector<1x1x8x128xf32>
    %354 = vector.shape_cast %353 : vector<1x1x8x128xf32> to vector<8x128xf32>
    %355 = arith.mulf %354, %4 : vector<8x128xf32>
    %356 = arith.addf %352, %355 : vector<8x128xf32>
    %c22_354 = arith.constant 22 : index
    %c1_355 = arith.constant 1 : index
    %c0_356 = arith.constant 0 : index
    %c0_357 = arith.constant 0 : index
    %357 = vector.load %arg2[%c22_354, %c1_355, %c0_356, %c0_357] : memref<26x4x8x128xf32, #tpu.memory_space<vmem>>, vector<1x1x8x128xf32>
    %358 = vector.shape_cast %357 : vector<1x1x8x128xf32> to vector<8x128xf32>
    %359 = arith.mulf %358, %7 : vector<8x128xf32>
    %360 = arith.addf %356, %359 : vector<8x128xf32>
    %c22_358 = arith.constant 22 : index
    %c3_359 = arith.constant 3 : index
    %c0_360 = arith.constant 0 : index
    %c0_361 = arith.constant 0 : index
    %361 = vector.load %arg2[%c22_358, %c3_359, %c0_360, %c0_361] : memref<26x4x8x128xf32, #tpu.memory_space<vmem>>, vector<1x1x8x128xf32>
    %362 = vector.shape_cast %361 : vector<1x1x8x128xf32> to vector<8x128xf32>
    %363 = math.absf %360 : vector<8x128xf32>
    %364 = arith.mulf %362, %363 : vector<8x128xf32>
    %365 = arith.addf %305, %364 : vector<8x128xf32>
    %c23 = arith.constant 23 : index
    %c2_362 = arith.constant 2 : index
    %c0_363 = arith.constant 0 : index
    %c0_364 = arith.constant 0 : index
    %366 = vector.load %arg2[%c23, %c2_362, %c0_363, %c0_364] : memref<26x4x8x128xf32, #tpu.memory_space<vmem>>, vector<1x1x8x128xf32>
    %367 = vector.shape_cast %366 : vector<1x1x8x128xf32> to vector<8x128xf32>
    %c23_365 = arith.constant 23 : index
    %c0_366 = arith.constant 0 : index
    %c0_367 = arith.constant 0 : index
    %c0_368 = arith.constant 0 : index
    %368 = vector.load %arg2[%c23_365, %c0_366, %c0_367, %c0_368] : memref<26x4x8x128xf32, #tpu.memory_space<vmem>>, vector<1x1x8x128xf32>
    %369 = vector.shape_cast %368 : vector<1x1x8x128xf32> to vector<8x128xf32>
    %370 = arith.mulf %369, %4 : vector<8x128xf32>
    %371 = arith.addf %367, %370 : vector<8x128xf32>
    %c23_369 = arith.constant 23 : index
    %c1_370 = arith.constant 1 : index
    %c0_371 = arith.constant 0 : index
    %c0_372 = arith.constant 0 : index
    %372 = vector.load %arg2[%c23_369, %c1_370, %c0_371, %c0_372] : memref<26x4x8x128xf32, #tpu.memory_space<vmem>>, vector<1x1x8x128xf32>
    %373 = vector.shape_cast %372 : vector<1x1x8x128xf32> to vector<8x128xf32>
    %374 = arith.mulf %373, %7 : vector<8x128xf32>
    %375 = arith.addf %371, %374 : vector<8x128xf32>
    %c23_373 = arith.constant 23 : index
    %c3_374 = arith.constant 3 : index
    %c0_375 = arith.constant 0 : index
    %c0_376 = arith.constant 0 : index
    %376 = vector.load %arg2[%c23_373, %c3_374, %c0_375, %c0_376] : memref<26x4x8x128xf32, #tpu.memory_space<vmem>>, vector<1x1x8x128xf32>
    %377 = vector.shape_cast %376 : vector<1x1x8x128xf32> to vector<8x128xf32>
    %378 = math.absf %375 : vector<8x128xf32>
    %379 = arith.mulf %377, %378 : vector<8x128xf32>
    %380 = arith.addf %320, %379 : vector<8x128xf32>
    %c24 = arith.constant 24 : index
    %c2_377 = arith.constant 2 : index
    %c0_378 = arith.constant 0 : index
    %c0_379 = arith.constant 0 : index
    %381 = vector.load %arg2[%c24, %c2_377, %c0_378, %c0_379] : memref<26x4x8x128xf32, #tpu.memory_space<vmem>>, vector<1x1x8x128xf32>
    %382 = vector.shape_cast %381 : vector<1x1x8x128xf32> to vector<8x128xf32>
    %c24_380 = arith.constant 24 : index
    %c0_381 = arith.constant 0 : index
    %c0_382 = arith.constant 0 : index
    %c0_383 = arith.constant 0 : index
    %383 = vector.load %arg2[%c24_380, %c0_381, %c0_382, %c0_383] : memref<26x4x8x128xf32, #tpu.memory_space<vmem>>, vector<1x1x8x128xf32>
    %384 = vector.shape_cast %383 : vector<1x1x8x128xf32> to vector<8x128xf32>
    %385 = arith.mulf %384, %4 : vector<8x128xf32>
    %386 = arith.addf %382, %385 : vector<8x128xf32>
    %c24_384 = arith.constant 24 : index
    %c1_385 = arith.constant 1 : index
    %c0_386 = arith.constant 0 : index
    %c0_387 = arith.constant 0 : index
    %387 = vector.load %arg2[%c24_384, %c1_385, %c0_386, %c0_387] : memref<26x4x8x128xf32, #tpu.memory_space<vmem>>, vector<1x1x8x128xf32>
    %388 = vector.shape_cast %387 : vector<1x1x8x128xf32> to vector<8x128xf32>
    %389 = arith.mulf %388, %7 : vector<8x128xf32>
    %390 = arith.addf %386, %389 : vector<8x128xf32>
    %c24_388 = arith.constant 24 : index
    %c3_389 = arith.constant 3 : index
    %c0_390 = arith.constant 0 : index
    %c0_391 = arith.constant 0 : index
    %391 = vector.load %arg2[%c24_388, %c3_389, %c0_390, %c0_391] : memref<26x4x8x128xf32, #tpu.memory_space<vmem>>, vector<1x1x8x128xf32>
    %392 = vector.shape_cast %391 : vector<1x1x8x128xf32> to vector<8x128xf32>
    %393 = math.absf %390 : vector<8x128xf32>
    %394 = arith.mulf %392, %393 : vector<8x128xf32>
    %395 = arith.addf %335, %394 : vector<8x128xf32>
    %396 = arith.addf %395, %350 : vector<8x128xf32>
    %397 = arith.addf %365, %380 : vector<8x128xf32>
    %398 = arith.addf %396, %397 : vector<8x128xf32>
    %cst_392 = arith.constant 5.000000e-01 : f32
    %399 = vector.broadcast %cst_392 : f32 to vector<8x128xf32>
    %400 = arith.mulf %399, %398 : vector<8x128xf32>
    %401 = math.tanh %400 : vector<8x128xf32>
    %cst_393 = arith.constant 5.000000e-01 : f32
    %402 = vector.broadcast %cst_393 : f32 to vector<8x128xf32>
    %403 = arith.mulf %402, %401 : vector<8x128xf32>
    %cst_394 = arith.constant 5.000000e-01 : f32
    %404 = vector.broadcast %cst_394 : f32 to vector<8x128xf32>
    %405 = arith.addf %403, %404 : vector<8x128xf32>
    %406 = arith.index_cast %1 : i32 to index
    %c0_395 = arith.constant 0 : index
    %407 = vector.load %arg3[%406, %c0_395] : memref<8x128xf32, #tpu.memory_space<vmem>>, vector<8x128xf32>
    tpu.vector_store %arg3[%406, %c0_395], %405 {strides = array<i32>} : memref<8x128xf32, #tpu.memory_space<vmem>>, vector<8x128xf32>,
    %c1_i32 = arith.constant 1 : i32
    return
  }
  func.func @transform_0(%arg0: i32) -> (i32, i32, i32) {
    %c0_i32 = arith.constant 0 : i32
    %c0_i32_0 = arith.constant 0 : i32
    %c0_i32_1 = arith.constant 0 : i32
    return %c0_i32, %arg0, %c0_i32_0 : i32, i32, i32
  }
  func.func @transform_1(%arg0: i32) -> (i32, i32, i32, i32) {
    %c0_i32 = arith.constant 0 : i32
    %c0_i32_0 = arith.constant 0 : i32
    %c0_i32_1 = arith.constant 0 : i32
    %c0_i32_2 = arith.constant 0 : i32
    %c0_i32_3 = arith.constant 0 : i32
    return %c0_i32, %c0_i32_0, %c0_i32_1, %c0_i32_2 : i32, i32, i32, i32
  }
  func.func @transform_2(%arg0: i32) -> (i32, i32) {
    %c0_i32 = arith.constant 0 : i32
    %c0_i32_0 = arith.constant 0 : i32
    return %arg0, %c0_i32 : i32, i32
  }
}

</mosaic_0001>

<llo_original>
// kernel: discriminator_1d_cnn.1
$region0: #{discriminator_1d_cnn.1}
  #allocation0 [shape = 'u32[]', space=smem, size = 0x4, offset = 0x4, fixed_abs, tag = 'smem constant byte address 0x4 - core index']
  #allocation1 [shape = 'u32[144,128]{1,0:T(1,128)}', space=vmem, size = 0x12000, scoped, tag = 'internal scratch']
  %s0 = inlined_call_operand.vmem [shape: f32[2,8,128], index: 0, kind: input, shape index: {}]
  %s1 = inlined_call_operand.vmem [shape: f32[26,4,8,128], index: 1, kind: input, shape index: {}]
  %s2 = inlined_call_operand.vmem [shape: f32[8,128], index: 2, kind: output, shape index: {}]
  %s3 = sld [smem:[#allocation0]]
  $region18: #{discriminator_1d_cnn.1} parent=0
    _
  %s5 = ssub.s32 1, %s3
  %s6 = scalar_select 0, %s5, %s3
  // Predicated region
  $region2: #{discriminator_1d_cnn.1} parent=0 // pred_check
    _
  $region3: #{discriminator_1d_cnn.1} parent=0 // pred_check_branch
    %8 = sbr.rel (0) target = $region5
  $region4: #{discriminator_1d_cnn.1} parent=0 // pred_region
    _
  $region5: #{discriminator_1d_cnn.1} parent=0 // pred_fallthru
    _
  // Predicated region
  $region6: #{discriminator_1d_cnn.1} parent=0 // pred_check
    _
  $region7: #{discriminator_1d_cnn.1} parent=0 // pred_check_branch
    %10 = sbr.rel (0) target = $region9
  $region8: #{discriminator_1d_cnn.1} parent=0 // pred_region
    _
  $region9: #{discriminator_1d_cnn.1} parent=0 // pred_fallthru
    _
  %v11 = vld [vmem:[%s0] sm:$0xff]
  %s12 = sadd.s32 0, 8
  %s13 = scalar_lea.vmem %s0, %s12
  %v14 = vld [vmem:[%s13] sm:$0xff]
  %s15 = scalar_lea.vmem %s1, 816
  %v16 = vld [vmem:[%s15] sm:$0xff]
  %s17 = scalar_lea.vmem %s1, 800
  %v18 = vld [vmem:[%s17] sm:$0xff]
  %v19 = vmul.f32 %v18, %v11
  %v20 = vadd.f32 %v16, %v19
  %s21 = scalar_lea.vmem %s1, 808
  %v22 = vld [vmem:[%s21] sm:$0xff]
  %v23 = vmul.f32 %v22, %v14
  %v24 = vadd.f32 %v20, %v23
  %s25 = scalar_lea.vmem %s1, 16
  %v26 = vld [vmem:[%s25] sm:$0xff]
  %v27 = vld [vmem:[%s1] sm:$0xff]
  %v28 = vmul.f32 %v27, %v11
  %v29 = vadd.f32 %v26, %v28
  %s30 = scalar_lea.vmem %s1, 8
  %v31 = vld [vmem:[%s30] sm:$0xff]
  %v32 = vmul.f32 %v31, %v14
  %v33 = vadd.f32 %v29, %v32
  %s34 = scalar_lea.vmem %s1, 24
  %v35 = vld [vmem:[%s34] sm:$0xff]
  %v36 = vand.u32 2147483647, %v33
  %v37 = vmul.f32 %v35, %v36
  %v38 = vadd.f32 %v24, %v37
  %s39 = scalar_lea.vmem %s1, 48
  %v40 = vld [vmem:[%s39] sm:$0xff]
  %s41 = scalar_lea.vmem %s1, 32
  %v42 = vld [vmem:[%s41] sm:$0xff]
  %v43 = vmul.f32 %v42, %v11
  %v44 = vadd.f32 %v40, %v43
  %s45 = scalar_lea.vmem %s1, 40
  %v46 = vld [vmem:[%s45] sm:$0xff]
  %v47 = vmul.f32 %v46, %v14
  %v48 = vadd.f32 %v44, %v47
  %s49 = scalar_lea.vmem %s1, 56
  %v50 = vld [vmem:[%s49] sm:$0xff]
  %v51 = vand.u32 2147483647, %v48
  %v52 = vmul.f32 %v50, %v51
  %v53 = vadd.f32 %v52, 0.0
  %s54 = scalar_lea.vmem %s1, 80
  %v55 = vld [vmem:[%s54] sm:$0xff]
  %s56 = scalar_lea.vmem %s1, 64
  %v57 = vld [vmem:[%s56] sm:$0xff]
  %v58 = vmul.f32 %v57, %v11
  %v59 = vadd.f32 %v55, %v58
  %s60 = scalar_lea.vmem %s1, 72
  %v61 = vld [vmem:[%s60] sm:$0xff]
  %v62 = vmul.f32 %v61, %v14
  %v63 = vadd.f32 %v59, %v62
  %s64 = scalar_lea.vmem %s1, 88
  %v65 = vld [vmem:[%s64] sm:$0xff]
  %v66 = vand.u32 2147483647, %v63
  %v67 = vmul.f32 %v65, %v66
  %v68 = vadd.f32 %v67, 0.0
  %s69 = scalar_lea.vmem %s1, 112
  %v70 = vld [vmem:[%s69] sm:$0xff]
  %s71 = scalar_lea.vmem %s1, 96
  %v72 = vld [vmem:[%s71] sm:$0xff]
  %v73 = vmul.f32 %v72, %v11
  %v74 = vadd.f32 %v70, %v73
  %s75 = scalar_lea.vmem %s1, 104
  %v76 = vld [vmem:[%s75] sm:$0xff]
  %v77 = vmul.f32 %v76, %v14
  %v78 = vadd.f32 %v74, %v77
  %s79 = scalar_lea.vmem %s1, 120
  %v80 = vld [vmem:[%s79] sm:$0xff]
  %v81 = vand.u32 2147483647, %v78
  %v82 = vmul.f32 %v80, %v81
  %v83 = vadd.f32 %v82, 0.0
  %s84 = scalar_lea.vmem %s1, 144
  %v85 = vld [vmem:[%s84] sm:$0xff]
  %s86 = scalar_lea.vmem %s1, 128
  %v87 = vld [vmem:[%s86] sm:$0xff]
  %v88 = vmul.f32 %v87, %v11
  %v89 = vadd.f32 %v85, %v88
  %s90 = scalar_lea.vmem %s1, 136
  %v91 = vld [vmem:[%s90] sm:$0xff]
  %v92 = vmul.f32 %v91, %v14
  %v93 = vadd.f32 %v89, %v92
  %s94 = scalar_lea.vmem %s1, 152
  %v95 = vld [vmem:[%s94] sm:$0xff]
  %v96 = vand.u32 2147483647, %v93
  %v97 = vmul.f32 %v95, %v96
  %v98 = vadd.f32 %v38, %v97
  %s99 = scalar_lea.vmem %s1, 176
  %v100 = vld [vmem:[%s99] sm:$0xff]
  %s101 = scalar_lea.vmem %s1, 160
  %v102 = vld [vmem:[%s101] sm:$0xff]
  %v103 = vmul.f32 %v102, %v11
  %v104 = vadd.f32 %v100, %v103
  %s105 = scalar_lea.vmem %s1, 168
  %v106 = vld [vmem:[%s105] sm:$0xff]
  %v107 = vmul.f32 %v106, %v14
  %v108 = vadd.f32 %v104, %v107
  %s109 = scalar_lea.vmem %s1, 184
  %v110 = vld [vmem:[%s109] sm:$0xff]
  %v111 = vand.u32 2147483647, %v108
  %v112 = vmul.f32 %v110, %v111
  %v113 = vadd.f32 %v53, %v112
  %s114 = scalar_lea.vmem %s1, 208
  %v115 = vld [vmem:[%s114] sm:$0xff]
  %s116 = scalar_lea.vmem %s1, 192
  %v117 = vld [vmem:[%s116] sm:$0xff]
  %v118 = vmul.f32 %v117, %v11
  %v119 = vadd.f32 %v115, %v118
  %s120 = scalar_lea.vmem %s1, 200
  %v121 = vld [vmem:[%s120] sm:$0xff]
  %v122 = vmul.f32 %v121, %v14
  %v123 = vadd.f32 %v119, %v122
  %s124 = scalar_lea.vmem %s1, 216
  %v125 = vld [vmem:[%s124] sm:$0xff]
  %v126 = vand.u32 2147483647, %v123
  %v127 = vmul.f32 %v125, %v126
  %v128 = vadd.f32 %v68, %v127
  %s129 = scalar_lea.vmem %s1, 240
  %v130 = vld [vmem:[%s129] sm:$0xff]
  %s131 = scalar_lea.vmem %s1, 224
  %v132 = vld [vmem:[%s131] sm:$0xff]
  %v133 = vmul.f32 %v132, %v11
  %v134 = vadd.f32 %v130, %v133
  %s135 = scalar_lea.vmem %s1, 232
  %v136 = vld [vmem:[%s135] sm:$0xff]
  %v137 = vmul.f32 %v136, %v14
  %v138 = vadd.f32 %v134, %v137
  %s139 = scalar_lea.vmem %s1, 248
  %v140 = vld [vmem:[%s139] sm:$0xff]
  %v141 = vand.u32 2147483647, %v138
  %v142 = vmul.f32 %v140, %v141
  %v143 = vadd.f32 %v83, %v142
  %s144 = scalar_lea.vmem %s1, 272
  %v145 = vld [vmem:[%s144] sm:$0xff]
  %s146 = scalar_lea.vmem %s1, 256
  %v147 = vld [vmem:[%s146] sm:$0xff]
  %v148 = vmul.f32 %v147, %v11
  %v149 = vadd.f32 %v145, %v148
  %s150 = scalar_lea.vmem %s1, 264
  %v151 = vld [vmem:[%s150] sm:$0xff]
  %v152 = vmul.f32 %v151, %v14
  %v153 = vadd.f32 %v149, %v152
  %s154 = scalar_lea.vmem %s1, 280
  %v155 = vld [vmem:[%s154] sm:$0xff]
  %v156 = vand.u32 2147483647, %v153
  %v157 = vmul.f32 %v155, %v156
  %v158 = vadd.f32 %v98, %v157
  %s159 = scalar_lea.vmem %s1, 304
  %v160 = vld [vmem:[%s159] sm:$0xff]
  %s161 = scalar_lea.vmem %s1, 288
  %v162 = vld [vmem:[%s161] sm:$0xff]
  %v163 = vmul.f32 %v162, %v11
  %v164 = vadd.f32 %v160, %v163
  %s165 = scalar_lea.vmem %s1, 296
  %v166 = vld [vmem:[%s165] sm:$0xff]
  %v167 = vmul.f32 %v166, %v14
  %v168 = vadd.f32 %v164, %v167
  %s169 = scalar_lea.vmem %s1, 312
  %v170 = vld [vmem:[%s169] sm:$0xff]
  %v171 = vand.u32 2147483647, %v168
  %v172 = vmul.f32 %v170, %v171
  %v173 = vadd.f32 %v113, %v172
  %s174 = scalar_lea.vmem %s1, 336
  %v175 = vld [vmem:[%s174] sm:$0xff]
  %s176 = scalar_lea.vmem %s1, 320
  %v177 = vld [vmem:[%s176] sm:$0xff]
  %v178 = vmul.f32 %v177, %v11
  %v179 = vadd.f32 %v175, %v178
  %s180 = scalar_lea.vmem %s1, 328
  %v181 = vld [vmem:[%s180] sm:$0xff]
  %v182 = vmul.f32 %v181, %v14
  %v183 = vadd.f32 %v179, %v182
  %s184 = scalar_lea.vmem %s1, 344
  %v185 = vld [vmem:[%s184] sm:$0xff]
  %v186 = vand.u32 2147483647, %v183
  %v187 = vmul.f32 %v185, %v186
  %v188 = vadd.f32 %v128, %v187
  %s189 = scalar_lea.vmem %s1, 368
  %v190 = vld [vmem:[%s189] sm:$0xff]
  %s191 = scalar_lea.vmem %s1, 352
  %v192 = vld [vmem:[%s191] sm:$0xff]
  %v193 = vmul.f32 %v192, %v11
  %v194 = vadd.f32 %v190, %v193
  %s195 = scalar_lea.vmem %s1, 360
  %v196 = vld [vmem:[%s195] sm:$0xff]
  %v197 = vmul.f32 %v196, %v14
  %v198 = vadd.f32 %v194, %v197
  %s199 = scalar_lea.vmem %s1, 376
  %v200 = vld [vmem:[%s199] sm:$0xff]
  %v201 = vand.u32 2147483647, %v198
  %v202 = vmul.f32 %v200, %v201
  %v203 = vadd.f32 %v143, %v202
  %s204 = scalar_lea.vmem %s1, 400
  %v205 = vld [vmem:[%s204] sm:$0xff]
  %s206 = scalar_lea.vmem %s1, 384
  %v207 = vld [vmem:[%s206] sm:$0xff]
  %v208 = vmul.f32 %v207, %v11
  %v209 = vadd.f32 %v205, %v208
  %s210 = scalar_lea.vmem %s1, 392
  %v211 = vld [vmem:[%s210] sm:$0xff]
  %v212 = vmul.f32 %v211, %v14
  %v213 = vadd.f32 %v209, %v212
  %s214 = scalar_lea.vmem %s1, 408
  %v215 = vld [vmem:[%s214] sm:$0xff]
  %v216 = vand.u32 2147483647, %v213
  %v217 = vmul.f32 %v215, %v216
  %v218 = vadd.f32 %v158, %v217
  %s219 = scalar_lea.vmem %s1, 432
  %v220 = vld [vmem:[%s219] sm:$0xff]
  %s221 = scalar_lea.vmem %s1, 416
  %v222 = vld [vmem:[%s221] sm:$0xff]
  %v223 = vmul.f32 %v222, %v11
  %v224 = vadd.f32 %v220, %v223
  %s225 = scalar_lea.vmem %s1, 424
  %v226 = vld [vmem:[%s225] sm:$0xff]
  %v227 = vmul.f32 %v226, %v14
  %v228 = vadd.f32 %v224, %v227
  %s229 = scalar_lea.vmem %s1, 440
  %v230 = vld [vmem:[%s229] sm:$0xff]
  %v231 = vand.u32 2147483647, %v228
  %v232 = vmul.f32 %v230, %v231
  %v233 = vadd.f32 %v173, %v232
  %s234 = scalar_lea.vmem %s1, 464
  %v235 = vld [vmem:[%s234] sm:$0xff]
  %s236 = scalar_lea.vmem %s1, 448
  %v237 = vld [vmem:[%s236] sm:$0xff]
  %v238 = vmul.f32 %v237, %v11
  %v239 = vadd.f32 %v235, %v238
  %s240 = scalar_lea.vmem %s1, 456
  %v241 = vld [vmem:[%s240] sm:$0xff]
  %v242 = vmul.f32 %v241, %v14
  %v243 = vadd.f32 %v239, %v242
  %s244 = scalar_lea.vmem %s1, 472
  %v245 = vld [vmem:[%s244] sm:$0xff]
  %v246 = vand.u32 2147483647, %v243
  %v247 = vmul.f32 %v245, %v246
  %v248 = vadd.f32 %v188, %v247
  %s249 = scalar_lea.vmem %s1, 496
  %v250 = vld [vmem:[%s249] sm:$0xff]
  %s251 = scalar_lea.vmem %s1, 480
  %v252 = vld [vmem:[%s251] sm:$0xff]
  %v253 = vmul.f32 %v252, %v11
  %v254 = vadd.f32 %v250, %v253
  %s255 = scalar_lea.vmem %s1, 488
  %v256 = vld [vmem:[%s255] sm:$0xff]
  %v257 = vmul.f32 %v256, %v14
  %v258 = vadd.f32 %v254, %v257
  %s259 = scalar_lea.vmem %s1, 504
  %v260 = vld [vmem:[%s259] sm:$0xff]
  %v261 = vand.u32 2147483647, %v258
  %v262 = vmul.f32 %v260, %v261
  %v263 = vadd.f32 %v203, %v262
  %s264 = scalar_lea.vmem %s1, 528
  %v265 = vld [vmem:[%s264] sm:$0xff]
  %s266 = scalar_lea.vmem %s1, 512
  %v267 = vld [vmem:[%s266] sm:$0xff]
  %v268 = vmul.f32 %v267, %v11
  %v269 = vadd.f32 %v265, %v268
  %s270 = scalar_lea.vmem %s1, 520
  %v271 = vld [vmem:[%s270] sm:$0xff]
  %v272 = vmul.f32 %v271, %v14
  %v273 = vadd.f32 %v269, %v272
  %s274 = scalar_lea.vmem %s1, 536
  %v275 = vld [vmem:[%s274] sm:$0xff]
  %v276 = vand.u32 2147483647, %v273
  %v277 = vmul.f32 %v275, %v276
  %v278 = vadd.f32 %v218, %v277
  %s279 = scalar_lea.vmem %s1, 560
  %v280 = vld [vmem:[%s279] sm:$0xff]
  %s281 = scalar_lea.vmem %s1, 544
  %v282 = vld [vmem:[%s281] sm:$0xff]
  %v283 = vmul.f32 %v282, %v11
  %v284 = vadd.f32 %v280, %v283
  %s285 = scalar_lea.vmem %s1, 552
  %v286 = vld [vmem:[%s285] sm:$0xff]
  %v287 = vmul.f32 %v286, %v14
  %v288 = vadd.f32 %v284, %v287
  %s289 = scalar_lea.vmem %s1, 568
  %v290 = vld [vmem:[%s289] sm:$0xff]
  %v291 = vand.u32 2147483647, %v288
  %v292 = vmul.f32 %v290, %v291
  %v293 = vadd.f32 %v233, %v292
  %s294 = scalar_lea.vmem %s1, 592
  %v295 = vld [vmem:[%s294] sm:$0xff]
  %s296 = scalar_lea.vmem %s1, 576
  %v297 = vld [vmem:[%s296] sm:$0xff]
  %v298 = vmul.f32 %v297, %v11
  %v299 = vadd.f32 %v295, %v298
  %s300 = scalar_lea.vmem %s1, 584
  %v301 = vld [vmem:[%s300] sm:$0xff]
  %v302 = vmul.f32 %v301, %v14
  %v303 = vadd.f32 %v299, %v302
  %s304 = scalar_lea.vmem %s1, 600
  %v305 = vld [vmem:[%s304] sm:$0xff]
  %v306 = vand.u32 2147483647, %v303
  %v307 = vmul.f32 %v305, %v306
  %v308 = vadd.f32 %v248, %v307
  %s309 = scalar_lea.vmem %s1, 624
  %v310 = vld [vmem:[%s309] sm:$0xff]
  %s311 = scalar_lea.vmem %s1, 608
  %v312 = vld [vmem:[%s311] sm:$0xff]
  %v313 = vmul.f32 %v312, %v11
  %v314 = vadd.f32 %v310, %v313
  %s315 = scalar_lea.vmem %s1, 616
  %v316 = vld [vmem:[%s315] sm:$0xff]
  %v317 = vmul.f32 %v316, %v14
  %v318 = vadd.f32 %v314, %v317
  %s319 = scalar_lea.vmem %s1, 632
  %v320 = vld [vmem:[%s319] sm:$0xff]
  %v321 = vand.u32 2147483647, %v318
  %v322 = vmul.f32 %v320, %v321
  %v323 = vadd.f32 %v263, %v322
  %s324 = scalar_lea.vmem %s1, 656
  %v325 = vld [vmem:[%s324] sm:$0xff]
  %s326 = scalar_lea.vmem %s1, 640
  %v327 = vld [vmem:[%s326] sm:$0xff]
  %v328 = vmul.f32 %v327, %v11
  %v329 = vadd.f32 %v325, %v328
  %s330 = scalar_lea.vmem %s1, 648
  %v331 = vld [vmem:[%s330] sm:$0xff]
  %v332 = vmul.f32 %v331, %v14
  %v333 = vadd.f32 %v329, %v332
  %s334 = scalar_lea.vmem %s1, 664
  %v335 = vld [vmem:[%s334] sm:$0xff]
  %v336 = vand.u32 2147483647, %v333
  %v337 = vmul.f32 %v335, %v336
  %v338 = vadd.f32 %v278, %v337
  %s339 = scalar_lea.vmem %s1, 688
  %v340 = vld [vmem:[%s339] sm:$0xff]
  %s341 = scalar_lea.vmem %s1, 672
  %v342 = vld [vmem:[%s341] sm:$0xff]
  %v343 = vmul.f32 %v342, %v11
  %v344 = vadd.f32 %v340, %v343
  %s345 = scalar_lea.vmem %s1, 680
  %v346 = vld [vmem:[%s345] sm:$0xff]
  %v347 = vmul.f32 %v346, %v14
  %v348 = vadd.f32 %v344, %v347
  %s349 = scalar_lea.vmem %s1, 696
  %v350 = vld [vmem:[%s349] sm:$0xff]
  %v351 = vand.u32 2147483647, %v348
  %v352 = vmul.f32 %v350, %v351
  %v353 = vadd.f32 %v293, %v352
  %s354 = scalar_lea.vmem %s1, 720
  %v355 = vld [vmem:[%s354] sm:$0xff]
  %s356 = scalar_lea.vmem %s1, 704
  %v357 = vld [vmem:[%s356] sm:$0xff]
  %v358 = vmul.f32 %v357, %v11
  %v359 = vadd.f32 %v355, %v358
  %s360 = scalar_lea.vmem %s1, 712
  %v361 = vld [vmem:[%s360] sm:$0xff]
  %v362 = vmul.f32 %v361, %v14
  %v363 = vadd.f32 %v359, %v362
  %s364 = scalar_lea.vmem %s1, 728
  %v365 = vld [vmem:[%s364] sm:$0xff]
  %v366 = vand.u32 2147483647, %v363
  %v367 = vmul.f32 %v365, %v366
  %v368 = vadd.f32 %v308, %v367
  %s369 = scalar_lea.vmem %s1, 752
  %v370 = vld [vmem:[%s369] sm:$0xff]
  %s371 = scalar_lea.vmem %s1, 736
  %v372 = vld [vmem:[%s371] sm:$0xff]
  %v373 = vmul.f32 %v372, %v11
  %v374 = vadd.f32 %v370, %v373
  %s375 = scalar_lea.vmem %s1, 744
  %v376 = vld [vmem:[%s375] sm:$0xff]
  %v377 = vmul.f32 %v376, %v14
  %v378 = vadd.f32 %v374, %v377
  %s379 = scalar_lea.vmem %s1, 760
  %v380 = vld [vmem:[%s379] sm:$0xff]
  %v381 = vand.u32 2147483647, %v378
  %v382 = vmul.f32 %v380, %v381
  %v383 = vadd.f32 %v323, %v382
  %s384 = scalar_lea.vmem %s1, 784
  %v385 = vld [vmem:[%s384] sm:$0xff]
  %s386 = scalar_lea.vmem %s1, 768
  %v387 = vld [vmem:[%s386] sm:$0xff]
  %v388 = vmul.f32 %v387, %v11
  %v389 = vadd.f32 %v385, %v388
  %s390 = scalar_lea.vmem %s1, 776
  %v391 = vld [vmem:[%s390] sm:$0xff]
  %v392 = vmul.f32 %v391, %v14
  %v393 = vadd.f32 %v389, %v392
  %s394 = scalar_lea.vmem %s1, 792
  %v395 = vld [vmem:[%s394] sm:$0xff]
  %v396 = vand.u32 2147483647, %v393
  %v397 = vmul.f32 %v395, %v396
  %v398 = vadd.f32 %v338, %v397
  %v399 = vadd.f32 %v398, %v353
  %v400 = vadd.f32 %v368, %v383
  %v401 = vadd.f32 %v399, %v400
  %v402 = vmul.f32 %v401, 0.5
  %v403 = vtanh.pop %v402
  %v404 = vmul.f32 %v403, 0.5
  %v405 = vadd.f32 %v404, 0.5
  %406 = vst [vmem:[%s2] sm:$0xff] %v405
  // Predicated region
  $region10: #{discriminator_1d_cnn.1} parent=0 // pred_check
    _
  $region11: #{discriminator_1d_cnn.1} parent=0 // pred_check_branch
    %408 = sbr.rel (0) target = $region13
  $region12: #{discriminator_1d_cnn.1} parent=0 // pred_region
    _
  $region13: #{discriminator_1d_cnn.1} parent=0 // pred_fallthru
    _
  // Predicated region
  $region14: #{discriminator_1d_cnn.1} parent=0 // pred_check
    _
  $region15: #{discriminator_1d_cnn.1} parent=0 // pred_check_branch
    %410 = sbr.rel (0) target = $region17
  $region16: #{discriminator_1d_cnn.1} parent=0 // pred_region
    _
  $region17: #{discriminator_1d_cnn.1} parent=0 // pred_fallthru
    _

</llo_original>
